<compile_context>
chip_gen: v6e
topology: v6e:2x2x1
jax: 0.10.0
libtpu: 0.0.40
codegen_flags: <defaults>
</compile_context>

<pallas_src>
import functools

import jax
import jax.numpy as jnp
from jax import lax
from jax.experimental import pallas as pl
from jax.experimental.pallas import tpu as pltpu


# ----------------------------------------------------------------------------
# Tap geometry for a 3x3 / dilation=2 / padding=2 conv on an (H, W) map that is
# flattened to (C, H*W): tap t = kh*3+kw reads position (h+dh, w+dw) with
# dh, dw in {-2, 0, +2}; out-of-range positions are the conv's zero padding.
# ----------------------------------------------------------------------------
_TAP_OFFSETS = tuple((2 * (kh - 1), 2 * (kw - 1))
                     for kh in range(3) for kw in range(3))


def _tap_masks(H, W):
    """(9, 1, H*W) f32 border-validity masks for the dilation-2/pad-2 taps."""
    hh = jnp.arange(H)[:, None]
    ww = jnp.arange(W)[None, :]
    ms = []
    for dh, dw in _TAP_OFFSETS:
        valid = ((hh + dh >= 0) & (hh + dh < H) &
                 (ww + dw >= 0) & (ww + dw < W))
        ms.append(valid.reshape(H * W))
    return jnp.stack(ms, axis=0).astype(jnp.float32).reshape(9, 1, H * W)


def _tap_shifts(H, W, roll_matches_jnp):
    """Static lane-roll amounts so that rolled[c, p] == x[c, p + dh*W + dw]."""
    HW = H * W
    shifts = []
    for dh, dw in _TAP_OFFSETS:
        off = dh * W + dw
        shifts.append(((-off) % HW) if roll_matches_jnp else (off % HW))
    return tuple(shifts)


def _probe_roll_convention():
    """One-time eager check of pltpu.roll's rotation direction (vs. jnp.roll)."""
    def k(x_ref, o_ref):
        o_ref[...] = pltpu.roll(x_ref[...], 1, axis=1)

    x = jnp.tile(jnp.arange(128, dtype=jnp.float32)[None, :], (8, 1))
    y = pl.pallas_call(
        k,
        out_shape=jax.ShapeDtypeStruct((8, 128), jnp.float32),
        grid=(1,),
        in_specs=[pl.BlockSpec((8, 128), lambda i: (0, 0))],
        out_specs=pl.BlockSpec((8, 128), lambda i: (0, 0)),
    )(x)
    # jnp.roll convention: result[0] == x[-1] == 127
    return bool(y[0, 0] == 127.0)


# ----------------------------------------------------------------------------
# Fused kernel: layer1(support) + masked pooling + layer1(query) + layer2
# ----------------------------------------------------------------------------
def _make_fused_kernel(shifts_s, shifts_q, Co):

    def conv_accum(z, m_ref, shifts, bias_col, tap_consts=None):
        # z         : (9*Co, HW)  per-tap channel contractions (M-stacked matmul)
        # m_ref     : (9, 1, HW)  border masks (VMEM ref)
        # bias_col  : (Co, 1)     bias folded into the accumulator init
        # tap_consts: optional (9*Co, 1) spatially-constant per-tap additions
        HW = z.shape[1]
        acc = jnp.broadcast_to(bias_col, (Co, HW))
        for t in range(9):
            zt = z[t * Co:(t + 1) * Co, :]               # 8-sublane aligned slice
            if shifts[t] != 0:                           # center tap needs no roll
                zt = pltpu.roll(zt, shifts[t], axis=1)   # XLU lane rotation
            if tap_consts is not None:
                zt = zt + tap_consts[t * Co:(t + 1) * Co, :]
            if shifts[t] != 0:                           # center tap mask == 1
                zt = m_ref[t] * zt                       # zero the padding border
            acc = acc + zt
        return acc

    def kernel(ann_ref, sup_ref, q_ref, ms_ref, mq_ref,
               w1_ref, w2q_ref, w2p_ref, b1_ref, b2_ref, o_ref):
        b1c = b1_ref[...]                                # (Co, 1)
        b2c = b2_ref[...]                                # (Co, 1)

        # ---- layer1(support): one matmul + 9 roll/mask combines + ReLU ----
        z1s = jnp.dot(w1_ref[...], sup_ref[0],
                      preferred_element_type=jnp.float32)            # (9Co, HWs)
        sfeat = jnp.maximum(conv_accum(z1s, ms_ref, shifts_s, b1c), 0.0)  # (Co, HWs)

        # ---- masked average pooling -> prototype (Co, 1) ----
        ann = ann_ref[0]                                              # (1, HWs)
        area = jnp.sum(ann, axis=1, keepdims=True) + 1e-4             # (1, 1)
        pooled = lax.dot_general(sfeat, ann, (((1,), (1,)), ((), ())),
                                 preferred_element_type=jnp.float32)  # (Co, 1)
        proto = pooled / area

        # ---- layer1(query) ----
        z1q = jnp.dot(w1_ref[...], q_ref[0],
                      preferred_element_type=jnp.float32)             # (9Co, HWq)
        qfeat = jnp.maximum(conv_accum(z1q, mq_ref, shifts_q, b1c), 0.0)  # (Co, HWq)

        # ---- layer2 on concat([query_feat, proto_map], channel) ----
        # query half: M-stacked matmul; prototype half: spatially constant, so
        # each tap collapses to the (Co, 1) vector  w2p_t @ proto.
        z2 = jnp.dot(w2q_ref[...], qfeat,
                     preferred_element_type=jnp.float32)              # (9Co, HWq)
        cvec = jnp.dot(w2p_ref[...], proto,
                       preferred_element_type=jnp.float32)            # (9Co, 1)
        out = jnp.maximum(
            conv_accum(z2, mq_ref, shifts_q, b2c, tap_consts=cvec), 0.0)
        o_ref[0] = out.astype(o_ref.dtype)               # lane-dense (Co, HWq) store

    return kernel


# ----------------------------------------------------------------------------
# Glue: bilinear resize with align_corners=True (matches F.interpolate)
# ----------------------------------------------------------------------------
def bilinear_resize_align_corners(x, out_h, out_w):
    """x: (B, H, W) -> (B, out_h, out_w)."""
    B, H, W = x.shape
    if (H, W) == (out_h, out_w):
        return x
    ys = jnp.linspace(0.0, H - 1, out_h) if out_h > 1 else jnp.zeros((1,))
    xs = jnp.linspace(0.0, W - 1, out_w) if out_w > 1 else jnp.zeros((1,))
    y0 = jnp.floor(ys).astype(jnp.int32)
    x0 = jnp.floor(xs).astype(jnp.int32)
    y1 = jnp.minimum(y0 + 1, H - 1)
    x1 = jnp.minimum(x0 + 1, W - 1)
    wy = (ys - y0)[None, :, None]
    wx = (xs - x0)[None, None, :]

    def gather(yi, xi):
        return x[:, yi, :][:, :, xi]

    top = gather(y0, x0) * (1.0 - wx) + gather(y0, x1) * wx
    bot = gather(y1, x0) * (1.0 - wx) + gather(y1, x1) * wx
    return top * (1.0 - wy) + bot * wy


# ----------------------------------------------------------------------------
# Full forward pass (inference mode).  NCHW in, NCHW out.
# ----------------------------------------------------------------------------
def dense_comparison_forward(support, annotation, query, params, *,
                             roll_matches_jnp=True):
    B, Ce, Hs, Ws = support.shape
    _, _, Hq, Wq = query.shape
    w1, b1, w2, b2 = params["w1"], params["b1"], params["w2"], params["b2"]
    Co = w1.shape[-1]
    assert w2.shape[2] == 2 * Co, "module requires layer2 in_channels == 2*out_channels"
    HWs, HWq = Hs * Ws, Hq * Wq

    # one-time weight re-layouts (plain JAX, outside the hot path):
    # stack the 9 taps along M so each conv is one (9*Co, Cin) @ (Cin, HW) matmul
    w1_all = jnp.transpose(w1.reshape(9, Ce, Co), (0, 2, 1)).reshape(9 * Co, Ce)
    w2_taps = w2.reshape(9, 2 * Co, Co)
    w2q_all = jnp.transpose(w2_taps[:, :Co, :], (0, 2, 1)).reshape(9 * Co, Co)  # query half
    w2p_all = jnp.transpose(w2_taps[:, Co:, :], (0, 2, 1)).reshape(9 * Co, Co)  # proto half
    b1_col = b1.reshape(Co, 1)
    b2_col = b2.reshape(Co, 1)

    # annotation -> float, bilinear resize (align_corners=True) to support HxW
    ann = bilinear_resize_align_corners(annotation.astype(jnp.float32), Hs, Ws)
    ann = ann.reshape(B, 1, HWs)

    # static tap geometry (masks are tiny constants, held in VMEM across the grid)
    masks_s = _tap_masks(Hs, Ws)
    masks_q = _tap_masks(Hq, Wq)
    shifts_s = _tap_shifts(Hs, Ws, roll_matches_jnp)
    shifts_q = _tap_shifts(Hq, Wq, roll_matches_jnp)

    kernel = _make_fused_kernel(shifts_s, shifts_q, Co)

    # NOTE(v7x): grid=(B,) + "parallel" -> one batch element per TensorCore.
    # TODO(synk): for B == 1 deployments, add a second parallel grid axis over
    # row bands so v7x's second TensorCore is not idle.
    out = pl.pallas_call(
        kernel,
        out_shape=jax.ShapeDtypeStruct((B, Co, HWq), jnp.float32),
        grid=(B,),
        in_specs=[
            pl.BlockSpec((1, 1, HWs), lambda b: (b, 0, 0)),     # annotation (resized)
            pl.BlockSpec((1, Ce, HWs), lambda b: (b, 0, 0)),    # support  (C, HW)
            pl.BlockSpec((1, Ce, HWq), lambda b: (b, 0, 0)),    # query    (C, HW)
            pl.BlockSpec((9, 1, HWs), lambda b: (0, 0, 0)),     # support border masks
            pl.BlockSpec((9, 1, HWq), lambda b: (0, 0, 0)),     # query border masks
            pl.BlockSpec((9 * Co, Ce), lambda b: (0, 0)),       # layer1 weights (M-stacked)
            pl.BlockSpec((9 * Co, Co), lambda b: (0, 0)),       # layer2 weights, query half
            pl.BlockSpec((9 * Co, Co), lambda b: (0, 0)),       # layer2 weights, proto half
            pl.BlockSpec((Co, 1), lambda b: (0, 0)),            # b1
            pl.BlockSpec((Co, 1), lambda b: (0, 0)),            # b2
        ],
        out_specs=pl.BlockSpec((1, Co, HWq), lambda b: (b, 0, 0)),
        compiler_params=pltpu.CompilerParams(dimension_semantics=("parallel",)),
    )(ann, support.reshape(B, Ce, HWs), query.reshape(B, Ce, HWq),
      masks_s, masks_q, w1_all, w2q_all, w2p_all, b1_col, b2_col)

    # free contiguous reshape -> NCHW (B, Co, Hq, Wq), same layout as PyTorch
    return out.reshape(B, Co, Hq, Wq)


# ----------------------------------------------------------------------------
# Pure-JAX reference (NCHW throughout)
# ----------------------------------------------------------------------------
def _ref_conv(x, w, b):
    y = lax.conv_general_dilated(
        x, w, window_strides=(1, 1), padding=((2, 2), (2, 2)),
        rhs_dilation=(2, 2), dimension_numbers=("NCHW", "HWIO", "NCHW"))
    return jax.nn.relu(y + b[None, :, None, None])


def _ref_forward(support, annotation, query, params):
    q = _ref_conv(query, params["w1"], params["b1"])        # (B, Co, Hq, Wq)
    s = _ref_conv(support, params["w1"], params["b1"])      # (B, Co, Hs, Ws)
    ann = bilinear_resize_align_corners(annotation.astype(jnp.float32),
                                        s.shape[2], s.shape[3])
    area = jnp.sum(ann, axis=(1, 2)) + 1e-4                 # (B,)
    pooled = jnp.sum(ann[:, None, :, :] * s, axis=(2, 3))   # (B, Co)
    proto = pooled / area[:, None]
    proto_map = jnp.broadcast_to(proto[:, :, None, None], q.shape)
    cat = jnp.concatenate([q, proto_map], axis=1)
    return _ref_conv(cat, params["w2"], params["b2"])       # (B, Co, Hq, Wq)


# ----------------------------------------------------------------------------
# Main
# ----------------------------------------------------------------------------
if __name__ == "__main__":
    # DenseComparisonModule(extractor_channels=4, in_channels=8, out_channels=8)
    Ce, Co = 4, 8                  # module requires out_channels == in_channels
    B, Hs, Ws = 2, 16, 16
    Hq, Wq = 16, 16
    Ha, Wa = 12, 12                # annotation at a different size -> exercises resize

    key = jax.random.PRNGKey(0)
    k1, k2, k3, k4, k5, k6, k7 = jax.random.split(key, 7)

    params = {
        "w1": 0.1 * jax.random.normal(k1, (3, 3, Ce, Co), jnp.float32),
        "b1": 0.1 * jax.random.normal(k2, (Co,), jnp.float32),
        "w2": 0.1 * jax.random.normal(k3, (3, 3, 2 * Co, Co), jnp.float32),
        "b2": 0.1 * jax.random.normal(k4, (Co,), jnp.float32),
    }

    support = jax.random.normal(k5, (B, Ce, Hs, Ws), jnp.float32)
    query = jax.random.normal(k6, (B, Ce, Hq, Wq), jnp.float32)
    annotation = (jax.random.uniform(k7, (B, Ha, Wa)) > 0.5).astype(jnp.float32)

    roll_ok = _probe_roll_convention()   # eager one-time check, outside the hot path
    fwd = jax.jit(functools.partial(dense_comparison_forward,
                                    roll_matches_jnp=roll_ok))
    out = jax.block_until_ready(fwd(support, annotation, query, params))

    ref = jax.block_until_ready(_ref_forward(support, annotation, query, params))
    assert out.shape == (B, Co, Hq, Wq)
    err = float(jnp.max(jnp.abs(out - ref)))
    assert jnp.allclose(out, ref, atol=1e-4, rtol=1e-4), err

    print("KERNEL_OK")
</pallas_src>

<mosaic_0001>
module attributes {stable_mosaic.version = 11 : i64} {
  func.func @k(%arg0: i32, %arg1: memref<8x128xf32, #tpu.memory_space<vmem>>, %arg2: memref<8x128xf32, #tpu.memory_space<vmem>>) attributes {dimension_semantics = [#tpu.dimension_semantics<arbitrary>], iteration_bounds = array<i64: 1>, scalar_prefetch = 0 : i64, scratch_operands = 0 : i64, tpu.core_type = #tpu.core_type<tc>, window_params = [{pipeline_mode = #tpu.pipeline_mode<synchronous>, transform_indices = @transform_0, window_bounds = array<i64: 8, 128>}, {pipeline_mode = #tpu.pipeline_mode<synchronous>, transform_indices = @transform_1, window_bounds = array<i64: 8, 128>}]} {
    %c0 = arith.constant 0 : index
    %c0_0 = arith.constant 0 : index
    %0 = vector.load %arg1[%c0, %c0_0] : memref<8x128xf32, #tpu.memory_space<vmem>>, vector<8x128xf32>
    %c1_i32 = arith.constant 1 : i32
    %1 = tpu.dynamic_rotate %0 by %c1_i32 dim 1 : vector<8x128xf32>, i32 -> vector<8x128xf32>
    %c0_1 = arith.constant 0 : index
    %c0_2 = arith.constant 0 : index
    %2 = vector.load %arg2[%c0_1, %c0_2] : memref<8x128xf32, #tpu.memory_space<vmem>>, vector<8x128xf32>
    tpu.vector_store %arg2[%c0_1, %c0_2], %1 {strides = array<i32>} : memref<8x128xf32, #tpu.memory_space<vmem>>, vector<8x128xf32>,
    return
  }
  func.func @transform_0(%arg0: i32) -> (i32, i32) {
    %c0_i32 = arith.constant 0 : i32
    %c0_i32_0 = arith.constant 0 : i32
    %c0_i32_1 = arith.constant 0 : i32
    return %c0_i32, %c0_i32_0 : i32, i32
  }
  func.func @transform_1(%arg0: i32) -> (i32, i32) {
    %c0_i32 = arith.constant 0 : i32
    %c0_i32_0 = arith.constant 0 : i32
    %c0_i32_1 = arith.constant 0 : i32
    return %c0_i32, %c0_i32_0 : i32, i32
  }
}

</mosaic_0001>

<llo_original>
// kernel: tpu_custom_call.1
$region0: #{tpu_custom_call.1}
  #allocation0 [shape = 'u32[]', space=smem, size = 0x4, offset = 0x4, fixed_abs, tag = 'smem constant byte address 0x4 - core index']
  #allocation1 [shape = 'u32[144,128]{1,0:T(1,128)}', space=vmem, size = 0x12000, scoped, tag = 'internal scratch']
  %s0 = inlined_call_operand.hbm [shape: f32[8,128], index: 0, kind: input, shape index: {}]
  %s1 = inlined_call_operand.hbm [shape: f32[8,128], index: 1, kind: output, shape index: {}]
  %s2 = sld [smem:[#allocation0]]
  $region18: #{tpu_custom_call.1} parent=0
    _
  %s4 = ssub.s32 1, %s2
  %s5 = scalar_select 0, %s4, %s2
  $region1: #{tpu_custom_call.1} parent=0
    #allocation2 [shape = 'u8[4096]{0}', space=vmem, size = 0x1000, scoped, tag = 'input window, operand 0, single buffered']
    #allocation3 [shape = 's32[1]{0}', space=sflag, size = 0x4, scoped, tag = 'scoped memory for tpu_custom_call.1']
    #allocation4 [shape = 's32[1]{0}', space=sflag, size = 0x4, scoped, tag = 'scoped memory for tpu_custom_call.1']
    #allocation5 [shape = 'u8[4096]{0}', space=vmem, size = 0x1000, scoped, tag = 'output window, operand 0, single buffered']
    %6 = vsyncpa [#allocation3], 0
    %7 = vsyncpa [#allocation4], 0
    // Predicated region
    $region2: #{tpu_custom_call.1} parent=1 // pred_check
      _
    $region3: #{tpu_custom_call.1} parent=1 // pred_check_branch
      %9 = sbr.rel (0) target = $region5
    $region4: #{tpu_custom_call.1} parent=1 // pred_region
      %s11 = ssub.s32 128, 128
      %12 = vsyncadd [#allocation3], %s11
      %s14 = sshll.u32 [#allocation2], 4
      %s15 = int_to_ptr.vmem [resolvable:$true] %s14
      %17 = dma.hbm_to_vmem [thread:$0]  %s0, 128, %s15, [#allocation3]
    $region5: #{tpu_custom_call.1} parent=1 // pred_fallthru
      _
    // Predicated region
    $region6: #{tpu_custom_call.1} parent=1 // pred_check
      _
    $region7: #{tpu_custom_call.1} parent=1 // pred_check_branch
      %19 = sbr.rel (0) target = $region9
    $region8: #{tpu_custom_call.1} parent=1 // pred_region
      %20 = dma.done [#allocation3], 128
    $region9: #{tpu_custom_call.1} parent=1 // pred_fallthru
      _
    %v21 = vld [vmem:[#allocation2] sm:$0xff]
    %22 = vrot.lane.b32.xlu0 %v21, 1
    %v23 = vpop.permute.xlu0 %22
    %24 = vst [vmem:[#allocation5] sm:$0xff] %v23
    // Predicated region
    $region10: #{tpu_custom_call.1} parent=1 // pred_check
      _
    $region11: #{tpu_custom_call.1} parent=1 // pred_check_branch
      %26 = sbr.rel (0) target = $region13
    $region12: #{tpu_custom_call.1} parent=1 // pred_region
      %s28 = ssub.s32 128, 128
      %29 = vsyncadd [#allocation4], %s28
      %s31 = sshll.u32 [#allocation5], 4
      %s32 = int_to_ptr.vmem [resolvable:$true] %s31
      %34 = dma.vmem_to_hbm [thread:$0]  %s32, 128, %s1, [#allocation4]
    $region13: #{tpu_custom_call.1} parent=1 // pred_fallthru
      _
    // Predicated region
    $region14: #{tpu_custom_call.1} parent=1 // pred_check
      _
    $region15: #{tpu_custom_call.1} parent=1 // pred_check_branch
      %36 = sbr.rel (0) target = $region17
    $region16: #{tpu_custom_call.1} parent=1 // pred_region
      %37 = dma.done [#allocation4], 128
    $region17: #{tpu_custom_call.1} parent=1 // pred_fallthru
      _
    %38 = vsyncpa [#allocation3], 1
    %39 = vsyncpa [#allocation4], 1

</llo_original>
